<compile_context>
chip_gen: v7x
topology: tpu7x:2x2x1
jax: 0.10.0
libtpu: 0.0.40
codegen_flags: <defaults>
</compile_context>

<pallas_src>
import functools

import jax
import jax.numpy as jnp
from jax import lax
from jax.experimental import pallas as pl
from jax.experimental.pallas import tpu as pltpu

_MIB = 1024 * 1024


# --------------------------------------------------------------------------
# Pallas kernel 1: ElectraMRCHead (dense -> gelu -> out_proj), fused, row-tiled.
# --------------------------------------------------------------------------
def _mrc_head_kernel(h_ref, w1_ref, b1_ref, w2t_ref, b2t_ref, out_ref):
    # dense: bf16 x bf16 on the MXU, f32 accumulation.
    x = jnp.dot(h_ref[...], w1_ref[...], preferred_element_type=jnp.float32)
    x = x + b1_ref[...]
    # TODO(synk): transformers' get_activation('gelu') is the erf-based GELU;
    # the tanh approximation is used for guaranteed Mosaic lowering.
    x = jax.nn.gelu(x, approximate=True)
    # out_proj in bf16 (f32 accumulate), computed transposed so rows land on
    # lanes: [Lp, TM] = w2t [Lp, D] contracted with x [TM, D] over D.
    x_bf16 = x.astype(jnp.bfloat16)
    logits_t = lax.dot_general(
        w2t_ref[...], x_bf16,
        dimension_numbers=(((1,), (1,)), ((), ())),
        preferred_element_type=jnp.float32)
    out_ref[...] = logits_t + b2t_ref[...]


def _vmem_capacity_bytes():
    try:
        return int(pltpu.get_tpu_info().vmem_capacity_bytes)
    except Exception:
        return 128 * _MIB  # v5e/v6e default if the query is unavailable


def _head_vmem_bytes(tm, D, Lp):
    """VMEM estimate with correct buffering counts (no double counting)."""
    return (2 * tm * D * 2          # h tiles, bf16, double-buffered
            + 2 * Lp * tm * 4       # out tiles, f32, double-buffered
            + D * D * 2 + D * 4     # resident w1 (bf16) + b1 (f32), single-buffered
            + Lp * D * 2 + Lp * 4   # resident w2t (bf16) + b2t (f32)
            + tm * D * 6)           # f32 GELU intermediate + bf16 copy


def _resident_spec(shape):
    """Constant-index, single-buffered BlockSpec for VMEM-resident weights."""
    index_map = lambda i: (0,) * len(shape)
    try:
        return pl.BlockSpec(shape, index_map, pipeline_mode=pl.Buffered(1))
    except (TypeError, AttributeError):
        # Older Pallas without pipeline_mode support: fall back to default.
        return pl.BlockSpec(shape, index_map)


def _choose_row_block(rows, requested, budget, D, Lp, tm_cap):
    tm_max = tm_cap if requested is None else max(int(requested), 128)
    if rows <= tm_max:
        return rows                       # single full-extent block
    tm = max((tm_max // 128) * 128, 128)  # lane-dense [Lp, TM] output blocks
    while tm > 256 and _head_vmem_bytes(tm, D, Lp) > budget:
        tm -= 128
    return tm


def mrc_head(hidden, w1, b1, w2, b2, *, row_block=None):
    """hidden: [B, S, D] (bf16) -> logits_t [Lp, B*S] (labels on sublanes, rows on lanes)."""
    B, S, D = hidden.shape
    L = w2.shape[1]
    Lp = ((L + 7) // 8) * 8               # pad label dim to a full sublane tile
    rows = B * S

    # Generation-aware tile / VMEM budget (v7x: 64 MiB VMEM; v5e/v6e: 128 MiB).
    cap = _vmem_capacity_bytes()
    large_vmem = cap > 96 * _MIB
    budget = min(48 * _MIB if large_vmem else 32 * _MIB, cap // 2)
    tm_cap = 2048 if large_vmem else 1024
    tm = _choose_row_block(rows, row_block, budget, D, Lp, tm_cap)
    grid = pl.cdiv(rows, tm)

    h2 = hidden.reshape(rows, D)
    if h2.dtype != jnp.bfloat16:          # backbone already emits bf16; no extra pass
        h2 = h2.astype(jnp.bfloat16)
    w1_b = w1.astype(jnp.bfloat16)
    b1_2d = b1.reshape(1, D).astype(jnp.float32)
    w2t = jnp.zeros((Lp, D), jnp.bfloat16).at[:L, :].set(w2.T.astype(jnp.bfloat16))
    b2t = jnp.zeros((Lp, 1), jnp.float32).at[:L, :].set(
        b2.reshape(L, 1).astype(jnp.float32))

    vmem_limit = int(min(budget, max(16 * _MIB, _head_vmem_bytes(tm, D, Lp) + 4 * _MIB)))

    out = pl.pallas_call(
        _mrc_head_kernel,
        out_shape=jax.ShapeDtypeStruct((Lp, rows), jnp.float32),
        grid=(grid,),
        in_specs=[
            pl.BlockSpec((tm, D), lambda i: (i, 0)),   # streamed row tiles
            _resident_spec((D, D)),                    # resident, single-buffered weights
            _resident_spec((1, D)),
            _resident_spec((Lp, D)),
            _resident_spec((Lp, 1)),
        ],
        out_specs=pl.BlockSpec((Lp, tm), lambda i: (0, i)),
        compiler_params=pltpu.CompilerParams(
            dimension_semantics=("parallel",),
            vmem_limit_bytes=vmem_limit),
    )(h2, w1_b, b1_2d, w2t, b2t)
    return out                                          # [Lp, rows] f32


# --------------------------------------------------------------------------
# Pallas kernel 2: fused start+end cross-entropy with ignore_index,
# batch-tiled, in-kernel loss/count accumulation.
# --------------------------------------------------------------------------
def _ce_pair_kernel(logits_ref, pos_ref, loss_ref, cnt_ref, *,
                    batch, tb, ignore_index):
    @pl.when(pl.program_id(0) == 0)
    def _():
        loss_ref[...] = jnp.zeros_like(loss_ref)
        cnt_ref[...] = jnp.zeros_like(cnt_ref)

    logits = logits_ref[...]                             # [2, TB, S] f32
    pos = pos_ref[...]                                   # [2, TB, 1] int32 (clamped)
    _, TB, S = logits.shape

    # log-sum-exp over the sequence axis
    m = jnp.max(logits, axis=-1, keepdims=True)
    lse = m + jnp.log(jnp.sum(jnp.exp(logits - m), axis=-1, keepdims=True))
    # gather target logit via one-hot built from an iota compare
    col = lax.broadcasted_iota(jnp.int32, (2, TB, S), 2)
    onehot = (col == pos).astype(jnp.float32)
    tgt = jnp.sum(logits * onehot, axis=-1, keepdims=True)

    # validity: not ignore_index, and row within the real batch (partial blocks)
    row = lax.broadcasted_iota(jnp.int32, (2, TB, 1), 1) + pl.program_id(0) * tb
    valid = jnp.logical_and(pos != ignore_index, row < batch)
    per_row = jnp.where(valid, lse - tgt, 0.0)

    loss_ref[...] += jnp.sum(per_row, axis=1)            # -> [2, 1]
    cnt_ref[...] += jnp.sum(valid.astype(jnp.float32), axis=1)


def ce_pair_loss(logits2, positions2, ignore_index):
    """logits2: [2, B, S] f32; positions2: [2, B]; ignore_index == S.
    Returns (mean_start_loss + mean_end_loss) / 2."""
    _, B, S = logits2.shape
    pos = jnp.clip(positions2.astype(jnp.int32), 0, ignore_index).reshape(2, B, 1)
    tb = B if B <= 512 else 512                          # wide batch tiles, memory-bound
    grid = pl.cdiv(B, tb)

    kernel = functools.partial(_ce_pair_kernel, batch=B, tb=tb,
                               ignore_index=ignore_index)
    loss_sum, valid_cnt = pl.pallas_call(
        kernel,
        out_shape=(
            jax.ShapeDtypeStruct((2, 1), jnp.float32),
            jax.ShapeDtypeStruct((2, 1), jnp.float32),
        ),
        grid=(grid,),
        in_specs=[
            pl.BlockSpec((2, tb, S), lambda i: (0, i, 0)),
            pl.BlockSpec((2, tb, 1), lambda i: (0, i, 0)),
        ],
        out_specs=(
            pl.BlockSpec((2, 1), lambda i: (0, 0)),      # accumulator
            pl.BlockSpec((2, 1), lambda i: (0, 0)),      # accumulator
        ),
        compiler_params=pltpu.CompilerParams(
            dimension_semantics=("arbitrary",)),
    )(logits2, pos)

    # TODO(synk): PyTorch's CrossEntropyLoss yields NaN when every row is ignored;
    # here the denominator is clamped to 1 and the per-task loss is 0 in that case.
    denom = jnp.maximum(valid_cnt[:, 0], 1.0)            # [2]
    losses = loss_sum[:, 0] / denom                      # [start_loss, end_loss]
    return (losses[0] + losses[1]) / 2.0


# --------------------------------------------------------------------------
# Model wrapper (glue in plain JAX).
# --------------------------------------------------------------------------
def init_params(key, vocab_size, dim, num_labels):
    k_emb, k_w1, k_b1, k_w2, k_b2 = jax.random.split(key, 5)
    scale = 1.0 / jnp.sqrt(jnp.float32(dim))
    return {
        "embed": jax.random.normal(k_emb, (vocab_size, dim), jnp.float32) * 0.02,
        "w1": jax.random.normal(k_w1, (dim, dim), jnp.float32) * scale,        # dense
        "b1": jax.random.normal(k_b1, (dim,), jnp.float32) * 0.01,
        "w2": jax.random.normal(k_w2, (dim, num_labels), jnp.float32) * scale,  # out_proj
        "b2": jax.random.normal(k_b2, (num_labels,), jnp.float32) * 0.01,
    }


def electra_mrc_forward(params, input_ids, input_mask,
                        start_positions=None, end_positions=None, *,
                        row_block=None):
    # TODO(synk): the full Electra transformer encoder is an injected external
    # module in the original code; here the backbone is a deterministic
    # synthetic embedding lookup masked by input_mask, emitting bf16 directly
    # so no separate f32->bf16 pass precedes the head kernel.
    emb = params["embed"].astype(jnp.bfloat16)
    hidden = emb[input_ids] * input_mask[..., None].astype(jnp.bfloat16)  # [B,S,D] bf16
    B, S, _ = hidden.shape

    logits_t = mrc_head(hidden, params["w1"], params["b1"],
                        params["w2"], params["b2"], row_block=row_block)  # [Lp, B*S]

    # logits.split(1, dim=-1).squeeze(-1): with the transposed layout these are
    # contiguous row slices (no strided gather).
    start_logits = logits_t[0].reshape(B, S)
    end_logits = logits_t[1].reshape(B, S)

    if start_positions is not None and end_positions is not None:
        if start_positions.ndim > 1:
            start_positions = start_positions.squeeze(-1)
        if end_positions.ndim > 1:
            end_positions = end_positions.squeeze(-1)
        ignored_index = S
        logits2 = logits_t[0:2].reshape(2, B, S)
        positions2 = jnp.stack([start_positions, end_positions], axis=0)
        return ce_pair_loss(logits2, positions2, ignored_index)
    return start_logits, end_logits


# --------------------------------------------------------------------------
if __name__ == "__main__":
    B, S, D, L, VOCAB = 4, 128, 128, 2, 100

    key = jax.random.PRNGKey(0)
    k_params, k_ids, k_sp, k_ep = jax.random.split(key, 4)

    params = init_params(k_params, VOCAB, D, L)
    input_ids = jax.random.randint(k_ids, (B, S), 0, VOCAB, dtype=jnp.int32)
    input_mask = jnp.ones((B, S), dtype=jnp.int32)
    start_positions = jax.random.randint(k_sp, (B,), 0, S, dtype=jnp.int32)
    end_positions = jax.random.randint(k_ep, (B,), 0, S, dtype=jnp.int32)

    # Inference path: (start_logits, end_logits).  Tile size is auto-selected
    # (full 512-row slab here -> single grid step, lane-dense transposed output).
    start_logits, end_logits = electra_mrc_forward(params, input_ids, input_mask)
    jax.block_until_ready((start_logits, end_logits))
    assert start_logits.shape == (B, S) and end_logits.shape == (B, S)
    assert bool(jnp.all(jnp.isfinite(start_logits)))
    assert bool(jnp.all(jnp.isfinite(end_logits)))

    # Training path: scalar total_loss from the fused start+end CE kernel.
    total_loss = electra_mrc_forward(params, input_ids, input_mask,
                                     start_positions, end_positions)
    jax.block_until_ready(total_loss)
    assert total_loss.shape == ()
    assert bool(jnp.isfinite(total_loss))

    print("KERNEL_OK")
</pallas_src>

<mosaic_0001>
module attributes {stable_mosaic.version = 11 : i64} {
  func.func @_mrc_head_kernel(%arg0: i32, %arg1: memref<512x128xbf16, #tpu.memory_space<vmem>>, %arg2: memref<128x128xbf16, #tpu.memory_space<vmem>>, %arg3: memref<1x128xf32, #tpu.memory_space<vmem>>, %arg4: memref<8x128xbf16, #tpu.memory_space<vmem>>, %arg5: memref<8x1xf32, #tpu.memory_space<vmem>>, %arg6: memref<8x512xf32, #tpu.memory_space<vmem>>) attributes {dimension_semantics = [#tpu.dimension_semantics<parallel>], iteration_bounds = array<i64: 1>, scalar_prefetch = 0 : i64, scratch_operands = 0 : i64, tpu.core_type = #tpu.core_type<tc>, window_params = [{transform_indices = @transform_0, window_bounds = array<i64: 512, 128>}, {pipeline_mode = #tpu.pipeline_mode<synchronous>, transform_indices = @transform_1, window_bounds = array<i64: 128, 128>}, {pipeline_mode = #tpu.pipeline_mode<synchronous>, transform_indices = @transform_2, window_bounds = array<i64: 1, 128>}, {pipeline_mode = #tpu.pipeline_mode<synchronous>, transform_indices = @transform_3, window_bounds = array<i64: 8, 128>}, {pipeline_mode = #tpu.pipeline_mode<synchronous>, transform_indices = @transform_4, window_bounds = array<i64: 8, 1>}, {transform_indices = @transform_5, window_bounds = array<i64: 8, 512>}]} {
    %c0 = arith.constant 0 : index
    %c0_0 = arith.constant 0 : index
    %0 = vector.load %arg1[%c0, %c0_0] : memref<512x128xbf16, #tpu.memory_space<vmem>>, vector<512x128xbf16>
    %c0_1 = arith.constant 0 : index
    %c0_2 = arith.constant 0 : index
    %1 = vector.load %arg2[%c0_1, %c0_2] : memref<128x128xbf16, #tpu.memory_space<vmem>>, vector<128x128xbf16>
    %cst = arith.constant dense<0.000000e+00> : vector<512x128xf32>
    %2 = tpu.matmul %0, %1, %cst {dimension_numbers = #tpu.dot_dimension_numbers<[1], [0], [0], [1], [0, 0, 1, 1], [], []>} : vector<512x128xbf16>, vector<128x128xbf16>, vector<512x128xf32> -> vector<512x128xf32>
    %c0_3 = arith.constant 0 : index
    %c0_4 = arith.constant 0 : index
    %3 = vector.load %arg3[%c0_3, %c0_4] : memref<1x128xf32, #tpu.memory_space<vmem>>, vector<1x128xf32>
    %4 = vector.broadcast %3 : vector<1x128xf32> to vector<512x128xf32>
    %5 = arith.addf %2, %4 : vector<512x128xf32>
    %6 = arith.mulf %5, %5 : vector<512x128xf32>
    %7 = arith.mulf %5, %6 : vector<512x128xf32>
    %cst_5 = arith.constant 4.471500e-02 : f32
    %8 = vector.broadcast %cst_5 : f32 to vector<512x128xf32>
    %9 = arith.mulf %8, %7 : vector<512x128xf32>
    %10 = arith.addf %5, %9 : vector<512x128xf32>
    %cst_6 = arith.constant 0.797884583 : f32
    %11 = vector.broadcast %cst_6 : f32 to vector<512x128xf32>
    %12 = arith.mulf %11, %10 : vector<512x128xf32>
    %13 = math.tanh %12 : vector<512x128xf32>
    %cst_7 = arith.constant 1.000000e+00 : f32
    %14 = vector.broadcast %cst_7 : f32 to vector<512x128xf32>
    %15 = arith.addf %14, %13 : vector<512x128xf32>
    %cst_8 = arith.constant 5.000000e-01 : f32
    %16 = vector.broadcast %cst_8 : f32 to vector<512x128xf32>
    %17 = arith.mulf %16, %15 : vector<512x128xf32>
    %18 = arith.mulf %5, %17 : vector<512x128xf32>
    %19 = arith.truncf %18 : vector<512x128xf32> to vector<512x128xbf16>
    %c0_9 = arith.constant 0 : index
    %c0_10 = arith.constant 0 : index
    %20 = vector.load %arg4[%c0_9, %c0_10] : memref<8x128xbf16, #tpu.memory_space<vmem>>, vector<8x128xbf16>
    %cst_11 = arith.constant dense<0.000000e+00> : vector<8x512xf32>
    %21 = tpu.matmul %20, %19, %cst_11 {dimension_numbers = #tpu.dot_dimension_numbers<[1], [1], [0], [0], [0, 0, 1, 0], [], []>} : vector<8x128xbf16>, vector<512x128xbf16>, vector<8x512xf32> -> vector<8x512xf32>
    %c0_12 = arith.constant 0 : index
    %c0_13 = arith.constant 0 : index
    %22 = vector.load %arg5[%c0_12, %c0_13] : memref<8x1xf32, #tpu.memory_space<vmem>>, vector<8x1xf32>
    %23 = vector.broadcast %22 : vector<8x1xf32> to vector<8x512xf32>
    %24 = arith.addf %21, %23 : vector<8x512xf32>
    %c0_14 = arith.constant 0 : index
    %c0_15 = arith.constant 0 : index
    %25 = vector.load %arg6[%c0_14, %c0_15] : memref<8x512xf32, #tpu.memory_space<vmem>>, vector<8x512xf32>
    tpu.vector_store %arg6[%c0_14, %c0_15], %24 {strides = array<i32>} : memref<8x512xf32, #tpu.memory_space<vmem>>, vector<8x512xf32>,
    return
  }
  func.func @transform_0(%arg0: i32) -> (i32, i32) {
    %c0_i32 = arith.constant 0 : i32
    %c0_i32_0 = arith.constant 0 : i32
    return %arg0, %c0_i32 : i32, i32
  }
  func.func @transform_1(%arg0: i32) -> (i32, i32) {
    %c0_i32 = arith.constant 0 : i32
    %c0_i32_0 = arith.constant 0 : i32
    %c0_i32_1 = arith.constant 0 : i32
    return %c0_i32, %c0_i32_0 : i32, i32
  }
  func.func @transform_2(%arg0: i32) -> (i32, i32) {
    %c0_i32 = arith.constant 0 : i32
    %c0_i32_0 = arith.constant 0 : i32
    %c0_i32_1 = arith.constant 0 : i32
    return %c0_i32, %c0_i32_0 : i32, i32
  }
  func.func @transform_3(%arg0: i32) -> (i32, i32) {
    %c0_i32 = arith.constant 0 : i32
    %c0_i32_0 = arith.constant 0 : i32
    %c0_i32_1 = arith.constant 0 : i32
    return %c0_i32, %c0_i32_0 : i32, i32
  }
  func.func @transform_4(%arg0: i32) -> (i32, i32) {
    %c0_i32 = arith.constant 0 : i32
    %c0_i32_0 = arith.constant 0 : i32
    %c0_i32_1 = arith.constant 0 : i32
    return %c0_i32, %c0_i32_0 : i32, i32
  }
  func.func @transform_5(%arg0: i32) -> (i32, i32) {
    %c0_i32 = arith.constant 0 : i32
    %c0_i32_0 = arith.constant 0 : i32
    return %c0_i32, %arg0 : i32, i32
  }
}

</mosaic_0001>

<llo_original>
// kernel: tpu_custom_call.1
$region0: #{tpu_custom_call.1}
  #allocation0 [shape = 'u32[]', space=smem, size = 0x4, offset = 0x4, fixed_abs, tag = 'smem constant byte address 0x4 - core index']
  #allocation1 [shape = 'u32[144,128]{1,0:T(1,128)}', space=vmem, size = 0x12000, scoped, tag = 'internal scratch']
  %s0 = inlined_call_operand.hbm [shape: bf16[512,128], index: 0, kind: input, shape index: {}]
  %s1 = inlined_call_operand.hbm [shape: bf16[128,128], index: 1, kind: input, shape index: {}]
  %s2 = inlined_call_operand.vmem [shape: f32[1,128], index: 2, kind: input, shape index: {}]
  %s3 = inlined_call_operand.vmem [shape: bf16[8,128], index: 3, kind: input, shape index: {}]
  %s4 = inlined_call_operand.vmem [shape: f32[8,1], index: 4, kind: input, shape index: {}]
  %s5 = inlined_call_operand.hbm [shape: f32[8,512], index: 5, kind: output, shape index: {}]
  %s6 = sld [smem:[#allocation0]]
  $region38: #{tpu_custom_call.1} parent=0
    _
  %s8 = ssub.s32 1, %s6
  %s9 = scalar_select 0, %s8, %s6
  $region1: #{tpu_custom_call.1} parent=0
    #allocation2 [shape = 'u8[131072]{0}', space=vmem, size = 0x20000, scoped, tag = 'input window, operand 0, single buffered']
    #allocation3 [shape = 's32[1]{0}', space=sflag, size = 0x4, scoped, tag = 'scoped memory for tpu_custom_call.1']
    #allocation4 [shape = 's32[1]{0}', space=sflag, size = 0x4, scoped, tag = 'scoped memory for tpu_custom_call.1']
    #allocation5 [shape = 'u8[32768]{0}', space=vmem, size = 0x8000, scoped, tag = 'input window, operand 1, single buffered']
    #allocation6 [shape = 's32[1]{0}', space=sflag, size = 0x4, scoped, tag = 'scoped memory for tpu_custom_call.1']
    #allocation7 [shape = 'u8[16384]{0}', space=vmem, size = 0x4000, scoped, tag = 'output window, operand 0, single buffered']
    %10 = vsyncpa [#allocation3], 0
    %11 = vsyncpa [#allocation6], 0
    %12 = vsyncpa [#allocation4], 0
    // Predicated region
    $region2: #{tpu_custom_call.1} parent=1 // pred_check
      _
    $region3: #{tpu_custom_call.1} parent=1 // pred_check_branch
      %14 = sbr.rel (0) target = $region5
    $region4: #{tpu_custom_call.1} parent=1 // pred_region
      %s16 = ssub.s32 4096, 4096
      %17 = vsyncadd [#allocation3], %s16
      %s18 = sshll.u32 [#allocation2], 4
      %s19 = int_to_ptr.vmem [resolvable:$true] %s18
      %24 = dma.hbm_to_vmem [thread:$0]  %s0, 4096, %s19, [#allocation3], 64, 64, 4
    $region5: #{tpu_custom_call.1} parent=1 // pred_fallthru
      _
    // Predicated region
    $region6: #{tpu_custom_call.1} parent=1 // pred_check
      _
    $region7: #{tpu_custom_call.1} parent=1 // pred_check_branch
      %26 = sbr.rel (0) target = $region9
    $region8: #{tpu_custom_call.1} parent=1 // pred_region
      %s28 = ssub.s32 1024, 1024
      %29 = vsyncadd [#allocation6], %s28
      %s30 = sshll.u32 [#allocation5], 4
      %s31 = int_to_ptr.vmem [resolvable:$true] %s30
      %36 = dma.hbm_to_vmem [thread:$0]  %s1, 1024, %s31, [#allocation6], 64, 64, 4
    $region9: #{tpu_custom_call.1} parent=1 // pred_fallthru
      _
    // Predicated region
    $region10: #{tpu_custom_call.1} parent=1 // pred_check
      _
    $region11: #{tpu_custom_call.1} parent=1 // pred_check_branch
      %38 = sbr.rel (0) target = $region13
    $region12: #{tpu_custom_call.1} parent=1 // pred_region
      _
    $region13: #{tpu_custom_call.1} parent=1 // pred_fallthru
      _
    // Predicated region
    $region14: #{tpu_custom_call.1} parent=1 // pred_check
      _
    $region15: #{tpu_custom_call.1} parent=1 // pred_check_branch
      %40 = sbr.rel (0) target = $region17
    $region16: #{tpu_custom_call.1} parent=1 // pred_region
      _
    $region17: #{tpu_custom_call.1} parent=1 // pred_fallthru
      _
    // Predicated region
    $region18: #{tpu_custom_call.1} parent=1 // pred_check
      _
    $region19: #{tpu_custom_call.1} parent=1 // pred_check_branch
      %42 = sbr.rel (0) target = $region21
    $region20: #{tpu_custom_call.1} parent=1 // pred_region
      _
    $region21: #{tpu_custom_call.1} parent=1 // pred_fallthru
      _
    // Predicated region
    $region22: #{tpu_custom_call.1} parent=1 // pred_check
      _
    $region23: #{tpu_custom_call.1} parent=1 // pred_check_branch
      %44 = sbr.rel (0) target = $region25
    $region24: #{tpu_custom_call.1} parent=1 // pred_region
      %45 = dma.done [#allocation3], 4096
    $region25: #{tpu_custom_call.1} parent=1 // pred_fallthru
      _
    // Predicated region
    $region26: #{tpu_custom_call.1} parent=1 // pred_check
      _
    $region27: #{tpu_custom_call.1} parent=1 // pred_check_branch
      %47 = sbr.rel (0) target = $region29
    $region28: #{tpu_custom_call.1} parent=1 // pred_region
      %48 = dma.done [#allocation6], 1024
    $region29: #{tpu_custom_call.1} parent=1 // pred_fallthru
      _
    %v50 = vld [vmem:[#allocation2] sm:$0xf]
    %v51 = vld [vmem:[#allocation2 + $0x4] sm:$0xf]
    %v52 = vld [vmem:[#allocation2 + $0x8] sm:$0xf]
    %v53 = vld [vmem:[#allocation2 + $0xc] sm:$0xf]
    %v54 = vld [vmem:[#allocation2 + $0x10] sm:$0xf]
    %v55 = vld [vmem:[#allocation2 + $0x14] sm:$0xf]
    %v56 = vld [vmem:[#allocation2 + $0x18] sm:$0xf]
    %v57 = vld [vmem:[#allocation2 + $0x1c] sm:$0xf]
    %v58 = vld [vmem:[#allocation2 + $0x20] sm:$0xf]
    %v59 = vld [vmem:[#allocation2 + $0x24] sm:$0xf]
    %v60 = vld [vmem:[#allocation2 + $0x28] sm:$0xf]
    %v61 = vld [vmem:[#allocation2 + $0x2c] sm:$0xf]
    %v62 = vld [vmem:[#allocation2 + $0x30] sm:$0xf]
    %v63 = vld [vmem:[#allocation2 + $0x34] sm:$0xf]
    %v64 = vld [vmem:[#allocation2 + $0x38] sm:$0xf]
    %v65 = vld [vmem:[#allocation2 + $0x3c] sm:$0xf]
    %v66 = vld [vmem:[#allocation2 + $0x40] sm:$0xf]
    %v67 = vld [vmem:[#allocation2 + $0x44] sm:$0xf]
    %v68 = vld [vmem:[#allocation2 + $0x48] sm:$0xf]
    %v69 = vld [vmem:[#allocation2 + $0x4c] sm:$0xf]
    %v70 = vld [vmem:[#allocation2 + $0x50] sm:$0xf]
    %v71 = vld [vmem:[#allocation2 + $0x54] sm:$0xf]
    %v72 = vld [vmem:[#allocation2 + $0x58] sm:$0xf]
    %v73 = vld [vmem:[#allocation2 + $0x5c] sm:$0xf]
    %v74 = vld [vmem:[#allocation2 + $0x60] sm:$0xf]
    %v75 = vld [vmem:[#allocation2 + $0x64] sm:$0xf]
    %v76 = vld [vmem:[#allocation2 + $0x68] sm:$0xf]
    %v77 = vld [vmem:[#allocation2 + $0x6c] sm:$0xf]
    %v78 = vld [vmem:[#allocation2 + $0x70] sm:$0xf]
    %v79 = vld [vmem:[#allocation2 + $0x74] sm:$0xf]
    %v80 = vld [vmem:[#allocation2 + $0x78] sm:$0xf]
    %v81 = vld [vmem:[#allocation2 + $0x7c] sm:$0xf]
    %v82 = vld [vmem:[#allocation2 + $0x80] sm:$0xf]
    %v83 = vld [vmem:[#allocation2 + $0x84] sm:$0xf]
    %v84 = vld [vmem:[#allocation2 + $0x88] sm:$0xf]
    %v85 = vld [vmem:[#allocation2 + $0x8c] sm:$0xf]
    %v86 = vld [vmem:[#allocation2 + $0x90] sm:$0xf]
    %v87 = vld [vmem:[#allocation2 + $0x94] sm:$0xf]
    %v88 = vld [vmem:[#allocation2 + $0x98] sm:$0xf]
    %v89 = vld [vmem:[#allocation2 + $0x9c] sm:$0xf]
    %v90 = vld [vmem:[#allocation2 + $0xa0] sm:$0xf]
    %v91 = vld [vmem:[#allocation2 + $0xa4] sm:$0xf]
    %v92 = vld [vmem:[#allocation2 + $0xa8] sm:$0xf]
    %v93 = vld [vmem:[#allocation2 + $0xac] sm:$0xf]
    %v94 = vld [vmem:[#allocation2 + $0xb0] sm:$0xf]
    %v95 = vld [vmem:[#allocation2 + $0xb4] sm:$0xf]
    %v96 = vld [vmem:[#allocation2 + $0xb8] sm:$0xf]
    %v97 = vld [vmem:[#allocation2 + $0xbc] sm:$0xf]
    %v98 = vld [vmem:[#allocation2 + $0xc0] sm:$0xf]
    %v99 = vld [vmem:[#allocation2 + $0xc4] sm:$0xf]
    %v100 = vld [vmem:[#allocation2 + $0xc8] sm:$0xf]
    %v101 = vld [vmem:[#allocation2 + $0xcc] sm:$0xf]
    %v102 = vld [vmem:[#allocation2 + $0xd0] sm:$0xf]
    %v103 = vld [vmem:[#allocation2 + $0xd4] sm:$0xf]
    %v104 = vld [vmem:[#allocation2 + $0xd8] sm:$0xf]
    %v105 = vld [vmem:[#allocation2 + $0xdc] sm:$0xf]
    %v106 = vld [vmem:[#allocation2 + $0xe0] sm:$0xf]
    %v107 = vld [vmem:[#allocation2 + $0xe4] sm:$0xf]
    %v108 = vld [vmem:[#allocation2 + $0xe8] sm:$0xf]
    %v109 = vld [vmem:[#allocation2 + $0xec] sm:$0xf]
    %v110 = vld [vmem:[#allocation2 + $0xf0] sm:$0xf]
    %v111 = vld [vmem:[#allocation2 + $0xf4] sm:$0xf]
    %v112 = vld [vmem:[#allocation2 + $0xf8] sm:$0xf]
    %v113 = vld [vmem:[#allocation2 + $0xfc] sm:$0xf]
    %v114 = vld [vmem:[#allocation5] sm:$0xf]
    %v115 = vld [vmem:[#allocation5 + $0x4] sm:$0xf]
    %v116 = vld [vmem:[#allocation5 + $0x8] sm:$0xf]
    %v117 = vld [vmem:[#allocation5 + $0xc] sm:$0xf]
    %v118 = vld [vmem:[#allocation5 + $0x10] sm:$0xf]
    %v119 = vld [vmem:[#allocation5 + $0x14] sm:$0xf]
    %v120 = vld [vmem:[#allocation5 + $0x18] sm:$0xf]
    %v121 = vld [vmem:[#allocation5 + $0x1c] sm:$0xf]
    %v122 = vld [vmem:[#allocation5 + $0x20] sm:$0xf]
    %v123 = vld [vmem:[#allocation5 + $0x24] sm:$0xf]
    %v124 = vld [vmem:[#allocation5 + $0x28] sm:$0xf]
    %v125 = vld [vmem:[#allocation5 + $0x2c] sm:$0xf]
    %v126 = vld [vmem:[#allocation5 + $0x30] sm:$0xf]
    %v127 = vld [vmem:[#allocation5 + $0x34] sm:$0xf]
    %v128 = vld [vmem:[#allocation5 + $0x38] sm:$0xf]
    %v129 = vld [vmem:[#allocation5 + $0x3c] sm:$0xf]
    %v130 = vld [vmem:[%s2] sm:$0x1]
    %v132 = vlaneseq
    %v133 = vshrl.u32 %v132, 7
    %v134 = vsub.s32 0, %v133
    %v135 = vrot.slane %v130, %v134
    %v201 = vunpack.c.l.b16 %v50
    %v202 = vunpack.c.l.b16 %v51
    %v203 = vunpack.c.l.b16 %v52
    %v204 = vunpack.c.l.b16 %v53
    %v205 = vunpack.c.l.b16 %v54
    %v206 = vunpack.c.l.b16 %v55
    %v207 = vunpack.c.l.b16 %v56
    %v208 = vunpack.c.l.b16 %v57
    %v209 = vunpack.c.l.b16 %v58
    %v210 = vunpack.c.l.b16 %v59
    %v211 = vunpack.c.l.b16 %v60
    %v212 = vunpack.c.l.b16 %v61
    %v213 = vunpack.c.l.b16 %v62
    %v214 = vunpack.c.l.b16 %v63
    %v215 = vunpack.c.l.b16 %v64
    %v216 = vunpack.c.l.b16 %v65
    %v217 = vunpack.c.l.b16 %v66
    %v218 = vunpack.c.l.b16 %v67
    %v219 = vunpack.c.l.b16 %v68
    %v220 = vunpack.c.l.b16 %v69
    %v221 = vunpack.c.l.b16 %v70
    %v222 = vunpack.c.l.b16 %v71
    %v223 = vunpack.c.l.b16 %v72
    %v224 = vunpack.c.l.b16 %v73
    %v225 = vunpack.c.l.b16 %v74
    %v226 = vunpack.c.l.b16 %v75
    %v227 = vunpack.c.l.b16 %v76
    %v228 = vunpack.c.l.b16 %v77
    %v229 = vunpack.c.l.b16 %v78
    %v230 = vunpack.c.l.b16 %v79
    %v231 = vunpack.c.l.b16 %v80
    %v232 = vunpack.c.l.b16 %v81
    %v233 = vunpack.c.l.b16 %v82
    %v234 = vunpack.c.l.b16 %v83
    %v235 = vunpack.c.l.b16 %v84
    %v236 = vunpack.c.l.b16 %v85
    %v237 = vunpack.c.l.b16 %v86
    %v238 = vunpack.c.l.b16 %v87
    %v239 = vunpack.c.l.b16 %v88
    %v240 = vunpack.c.l.b16 %v89
    %v241 = vunpack.c.l.b16 %v90
    %v242 = vunpack.c.l.b16 %v91
    %v243 = vunpack.c.l.b16 %v92
    %v244 = vunpack.c.l.b16 %v93
    %v245 = vunpack.c.l.b16 %v94
    %v246 = vunpack.c.l.b16 %v95
    %v247 = vunpack.c.l.b16 %v96
    %v248 = vunpack.c.l.b16 %v97
    %v249 = vunpack.c.l.b16 %v98
    %v250 = vunpack.c.l.b16 %v99
    %v251 = vunpack.c.l.b16 %v100
    %v252 = vunpack.c.l.b16 %v101
    %v253 = vunpack.c.l.b16 %v102
    %v254 = vunpack.c.l.b16 %v103
    %v255 = vunpack.c.l.b16 %v104
    %v256 = vunpack.c.l.b16 %v105
    %v257 = vunpack.c.l.b16 %v106
    %v258 = vunpack.c.l.b16 %v107
    %v259 = vunpack.c.l.b16 %v108
    %v260 = vunpack.c.l.b16 %v109
    %v261 = vunpack.c.l.b16 %v110
    %v262 = vunpack.c.l.b16 %v111
    %v263 = vunpack.c.l.b16 %v112
    %v264 = vunpack.c.l.b16 %v113
    %v265 = vpack.c.b16 %v202, %v201
    %v266 = vpack.c.b16 %v204, %v203
    %v267 = vpack.c.b16 %v206, %v205
    %v268 = vpack.c.b16 %v208, %v207
    %v269 = vpack.c.b16 %v210, %v209
    %v270 = vpack.c.b16 %v212, %v211
    %v271 = vpack.c.b16 %v214, %v213
    %v272 = vpack.c.b16 %v216, %v215
    %v273 = vpack.c.b16 %v218, %v217
    %v274 = vpack.c.b16 %v220, %v219
    %v275 = vpack.c.b16 %v222, %v221
    %v276 = vpack.c.b16 %v224, %v223
    %v277 = vpack.c.b16 %v226, %v225
    %v278 = vpack.c.b16 %v228, %v227
    %v279 = vpack.c.b16 %v230, %v229
    %v280 = vpack.c.b16 %v232, %v231
    %v281 = vpack.c.b16 %v234, %v233
    %v282 = vpack.c.b16 %v236, %v235
    %v283 = vpack.c.b16 %v238, %v237
    %v284 = vpack.c.b16 %v240, %v239
    %v285 = vpack.c.b16 %v242, %v241
    %v286 = vpack.c.b16 %v244, %v243
    %v287 = vpack.c.b16 %v246, %v245
    %v288 = vpack.c.b16 %v248, %v247
    %v289 = vpack.c.b16 %v250, %v249
    %v290 = vpack.c.b16 %v252, %v251
    %v291 = vpack.c.b16 %v254, %v253
    %v292 = vpack.c.b16 %v256, %v255
    %v293 = vpack.c.b16 %v258, %v257
    %v294 = vpack.c.b16 %v260, %v259
    %v295 = vpack.c.b16 %v262, %v261
    %v296 = vpack.c.b16 %v264, %v263
    %v345 = vunpack.c.l.b16 %v114
    %v346 = vunpack.c.l.b16 %v115
    %v347 = vunpack.c.l.b16 %v116
    %v348 = vunpack.c.l.b16 %v117
    %v349 = vunpack.c.l.b16 %v118
    %v350 = vunpack.c.l.b16 %v119
    %v351 = vunpack.c.l.b16 %v120
    %v352 = vunpack.c.l.b16 %v121
    %v353 = vunpack.c.l.b16 %v122
    %v354 = vunpack.c.l.b16 %v123
    %v355 = vunpack.c.l.b16 %v124
    %v356 = vunpack.c.l.b16 %v125
    %v357 = vunpack.c.l.b16 %v126
    %v358 = vunpack.c.l.b16 %v127
    %v359 = vunpack.c.l.b16 %v128
    %v360 = vunpack.c.l.b16 %v129
    %v361 = vpack.c.b16 %v346, %v345
    %v362 = vpack.c.b16 %v348, %v347
    %v363 = vpack.c.b16 %v350, %v349
    %v364 = vpack.c.b16 %v352, %v351
    %v365 = vpack.c.b16 %v354, %v353
    %v366 = vpack.c.b16 %v356, %v355
    %v367 = vpack.c.b16 %v358, %v357
    %v368 = vpack.c.b16 %v360, %v359
    %377 = vmatprep.subr.bf16.mxu0 0
    %378 = vmatpush1.bf16.msra.mxu0 %v361
    %379 = vmatprep.subr.bf16.mxu0 0
    %380 = vmatpush1.bf16.msra.mxu0 %v362
    %381 = vmatprep.subr.bf16.mxu0 0
    %382 = vmatpush1.bf16.msra.mxu0 %v363
    %383 = vmatprep.subr.bf16.mxu0 0
    %384 = vmatpush1.bf16.msra.mxu0 %v364
    %385 = vmatprep.subr.bf16.mxu0 0
    %386 = vmatpush1.bf16.msra.mxu0 %v365
    %387 = vmatprep.subr.bf16.mxu0 0
    %388 = vmatpush1.bf16.msra.mxu0 %v366
    %389 = vmatprep.subr.bf16.mxu0 0
    %390 = vmatpush1.bf16.msra.mxu0 %v367
    %391 = vmatprep.subr.bf16.mxu0 0
    %392 = vmatpush1.bf16.msra.mxu0 %v368
    %393 = vmatprep.subr.bf16.mxu0 0
    %394 = vmatpush1.bf16.msra.mxu0 0
    %395 = vmatprep.subr.bf16.mxu0 0
    %396 = vmatpush1.bf16.msra.mxu0 0
    %397 = vmatprep.subr.bf16.mxu0 0
    %398 = vmatpush1.bf16.msra.mxu0 0
    %399 = vmatprep.subr.bf16.mxu0 0
    %400 = vmatpush1.bf16.msra.mxu0 0
    %401 = vmatprep.subr.bf16.mxu0 0
    %402 = vmatpush1.bf16.msra.mxu0 0
    %403 = vmatprep.subr.bf16.mxu0 0
    %404 = vmatpush1.bf16.msra.mxu0 0
    %405 = vmatprep.subr.bf16.mxu0 0
    %406 = vmatpush1.bf16.msra.mxu0 0
    %407 = vmatprep.subr.bf16.mxu0 0
    %408 = vmatpush1.bf16.msra.mxu0 0
    %409 = vmatprep.mubr.bf16.mxu0 0
    %410 = vmatmul.mubr.bf16.gmra.mrb[0].mxu0 %v265
    %v411 = vpop.f32.mrb[0].mxu0
    %v412 = vadd.f32 %v135, %v411
    %v413 = vpop.f32.mrb[0].mxu0
    %v414 = vpop.f32.mrb[0].mxu0
    %v415 = vadd.f32 %v135, %v414
    %v416 = vpop.f32.mrb[0].mxu0
    %417 = vmatprep.mubr.bf16.mxu0 0
    %418 = vmatmul.mubr.bf16.gmra.mrb[0].mxu0 %v266
    %v419 = vpop.f32.mrb[0].mxu0
    %v420 = vadd.f32 %v135, %v419
    %v421 = vpop.f32.mrb[0].mxu0
    %v422 = vpop.f32.mrb[0].mxu0
    %v423 = vadd.f32 %v135, %v422
    %v424 = vpop.f32.mrb[0].mxu0
    %425 = vmatprep.mubr.bf16.mxu0 0
    %426 = vmatmul.mubr.bf16.gmra.mrb[0].mxu0 %v267
    %v427 = vpop.f32.mrb[0].mxu0
    %v428 = vadd.f32 %v135, %v427
    %v429 = vpop.f32.mrb[0].mxu0
    %v430 = vpop.f32.mrb[0].mxu0
    %v431 = vadd.f32 %v135, %v430
    %v432 = vpop.f32.mrb[0].mxu0
    %433 = vmatprep.mubr.bf16.mxu0 0
    %434 = vmatmul.mubr.bf16.gmra.mrb[0].mxu0 %v268
    %v435 = vpop.f32.mrb[0].mxu0
    %v436 = vadd.f32 %v135, %v435
    %v437 = vpop.f32.mrb[0].mxu0
    %v438 = vpop.f32.mrb[0].mxu0
    %v439 = vadd.f32 %v135, %v438
    %v440 = vpop.f32.mrb[0].mxu0
    %441 = vmatprep.mubr.bf16.mxu0 0
    %442 = vmatmul.mubr.bf16.gmra.mrb[0].mxu0 %v269
    %v443 = vpop.f32.mrb[0].mxu0
    %v444 = vadd.f32 %v135, %v443
    %v445 = vpop.f32.mrb[0].mxu0
    %v446 = vpop.f32.mrb[0].mxu0
    %v447 = vadd.f32 %v135, %v446
    %v448 = vpop.f32.mrb[0].mxu0
    %449 = vmatprep.mubr.bf16.mxu0 0
    %450 = vmatmul.mubr.bf16.gmra.mrb[0].mxu0 %v270
    %v451 = vpop.f32.mrb[0].mxu0
    %v452 = vadd.f32 %v135, %v451
    %v453 = vpop.f32.mrb[0].mxu0
    %v454 = vpop.f32.mrb[0].mxu0
    %v455 = vadd.f32 %v135, %v454
    %v456 = vpop.f32.mrb[0].mxu0
    %457 = vmatprep.mubr.bf16.mxu0 0
    %458 = vmatmul.mubr.bf16.gmra.mrb[0].mxu0 %v271
    %v459 = vpop.f32.mrb[0].mxu0
    %v460 = vadd.f32 %v135, %v459
    %v461 = vpop.f32.mrb[0].mxu0
    %v462 = vpop.f32.mrb[0].mxu0
    %v463 = vadd.f32 %v135, %v462
    %v464 = vpop.f32.mrb[0].mxu0
    %465 = vmatprep.mubr.bf16.mxu0 0
    %466 = vmatmul.mubr.bf16.gmra.mrb[0].mxu0 %v272
    %v467 = vpop.f32.mrb[0].mxu0
    %v468 = vadd.f32 %v135, %v467
    %v469 = vpop.f32.mrb[0].mxu0
    %v470 = vpop.f32.mrb[0].mxu0
    %v471 = vadd.f32 %v135, %v470
    %v472 = vpop.f32.mrb[0].mxu0
    %473 = vmatprep.mubr.bf16.mxu0 0
    %474 = vmatmul.mubr.bf16.gmra.mrb[0].mxu0 %v273
    %v475 = vpop.f32.mrb[0].mxu0
    %v476 = vadd.f32 %v135, %v475
    %v477 = vpop.f32.mrb[0].mxu0
    %v478 = vpop.f32.mrb[0].mxu0
    %v479 = vadd.f32 %v135, %v478
    %v480 = vpop.f32.mrb[0].mxu0
    %481 = vmatprep.mubr.bf16.mxu0 0
    %482 = vmatmul.mubr.bf16.gmra.mrb[0].mxu0 %v274
    %v483 = vpop.f32.mrb[0].mxu0
    %v484 = vadd.f32 %v135, %v483
    %v485 = vpop.f32.mrb[0].mxu0
    %v486 = vpop.f32.mrb[0].mxu0
    %v487 = vadd.f32 %v135, %v486
    %v488 = vpop.f32.mrb[0].mxu0
    %489 = vmatprep.mubr.bf16.mxu0 0
    %490 = vmatmul.mubr.bf16.gmra.mrb[0].mxu0 %v275
    %v491 = vpop.f32.mrb[0].mxu0
    %v492 = vadd.f32 %v135, %v491
    %v493 = vpop.f32.mrb[0].mxu0
    %v494 = vpop.f32.mrb[0].mxu0
    %v495 = vadd.f32 %v135, %v494
    %v496 = vpop.f32.mrb[0].mxu0
    %497 = vmatprep.mubr.bf16.mxu0 0
    %498 = vmatmul.mubr.bf16.gmra.mrb[0].mxu0 %v276
    %v499 = vpop.f32.mrb[0].mxu0
    %v500 = vadd.f32 %v135, %v499
    %v501 = vpop.f32.mrb[0].mxu0
    %v502 = vpop.f32.mrb[0].mxu0
    %v503 = vadd.f32 %v135, %v502
    %v504 = vpop.f32.mrb[0].mxu0
    %505 = vmatprep.mubr.bf16.mxu0 0
    %506 = vmatmul.mubr.bf16.gmra.mrb[0].mxu0 %v277
    %v507 = vpop.f32.mrb[0].mxu0
    %v508 = vadd.f32 %v135, %v507
    %v509 = vpop.f32.mrb[0].mxu0
    %v510 = vpop.f32.mrb[0].mxu0
    %v511 = vadd.f32 %v135, %v510
    %v512 = vpop.f32.mrb[0].mxu0
    %513 = vmatprep.mubr.bf16.mxu0 0
    %514 = vmatmul.mubr.bf16.gmra.mrb[0].mxu0 %v278
    %v515 = vpop.f32.mrb[0].mxu0
    %v516 = vadd.f32 %v135, %v515
    %v517 = vpop.f32.mrb[0].mxu0
    %v518 = vpop.f32.mrb[0].mxu0
    %v519 = vadd.f32 %v135, %v518
    %v520 = vpop.f32.mrb[0].mxu0
    %521 = vmatprep.mubr.bf16.mxu0 0
    %522 = vmatmul.mubr.bf16.gmra.mrb[0].mxu0 %v279
    %v523 = vpop.f32.mrb[0].mxu0
    %v524 = vadd.f32 %v135, %v523
    %v525 = vpop.f32.mrb[0].mxu0
    %v526 = vpop.f32.mrb[0].mxu0
    %v527 = vadd.f32 %v135, %v526
    %v528 = vpop.f32.mrb[0].mxu0
    %529 = vmatprep.mubr.bf16.mxu0 0
    %530 = vmatmul.mubr.bf16.gmra.mrb[0].mxu0 %v280
    %v531 = vpop.f32.mrb[0].mxu0
    %v532 = vadd.f32 %v135, %v531
    %v533 = vpop.f32.mrb[0].mxu0
    %v534 = vpop.f32.mrb[0].mxu0
    %v535 = vadd.f32 %v135, %v534
    %v536 = vpop.f32.mrb[0].mxu0
    %537 = vmatprep.mubr.bf16.mxu0 0
    %538 = vmatmul.mubr.bf16.gmra.mrb[0].mxu0 %v281
    %v539 = vpop.f32.mrb[0].mxu0
    %v540 = vadd.f32 %v135, %v539
    %v541 = vpop.f32.mrb[0].mxu0
    %v542 = vpop.f32.mrb[0].mxu0
    %v543 = vadd.f32 %v135, %v542
    %v544 = vpop.f32.mrb[0].mxu0
    %545 = vmatprep.mubr.bf16.mxu0 0
    %546 = vmatmul.mubr.bf16.gmra.mrb[0].mxu0 %v282
    %v547 = vpop.f32.mrb[0].mxu0
    %v548 = vadd.f32 %v135, %v547
    %v549 = vpop.f32.mrb[0].mxu0
    %v550 = vpop.f32.mrb[0].mxu0
    %v551 = vadd.f32 %v135, %v550
    %v552 = vpop.f32.mrb[0].mxu0
    %553 = vmatprep.mubr.bf16.mxu0 0
    %554 = vmatmul.mubr.bf16.gmra.mrb[0].mxu0 %v283
    %v555 = vpop.f32.mrb[0].mxu0
    %v556 = vadd.f32 %v135, %v555
    %v557 = vpop.f32.mrb[0].mxu0
    %v558 = vpop.f32.mrb[0].mxu0
    %v559 = vadd.f32 %v135, %v558
    %v560 = vpop.f32.mrb[0].mxu0
    %561 = vmatprep.mubr.bf16.mxu0 0
    %562 = vmatmul.mubr.bf16.gmra.mrb[0].mxu0 %v284
    %v563 = vpop.f32.mrb[0].mxu0
    %v564 = vadd.f32 %v135, %v563
    %v565 = vpop.f32.mrb[0].mxu0
    %v566 = vpop.f32.mrb[0].mxu0
    %v567 = vadd.f32 %v135, %v566
    %v568 = vpop.f32.mrb[0].mxu0
    %569 = vmatprep.mubr.bf16.mxu0 0
    %570 = vmatmul.mubr.bf16.gmra.mrb[0].mxu0 %v285
    %v571 = vpop.f32.mrb[0].mxu0
    %v572 = vadd.f32 %v135, %v571
    %v573 = vpop.f32.mrb[0].mxu0
    %v574 = vpop.f32.mrb[0].mxu0
    %v575 = vadd.f32 %v135, %v574
    %v576 = vpop.f32.mrb[0].mxu0
    %577 = vmatprep.mubr.bf16.mxu0 0
    %578 = vmatmul.mubr.bf16.gmra.mrb[0].mxu0 %v286
    %v579 = vpop.f32.mrb[0].mxu0
    %v580 = vadd.f32 %v135, %v579
    %v581 = vpop.f32.mrb[0].mxu0
    %v582 = vpop.f32.mrb[0].mxu0
    %v583 = vadd.f32 %v135, %v582
    %v584 = vpop.f32.mrb[0].mxu0
    %585 = vmatprep.mubr.bf16.mxu0 0
    %586 = vmatmul.mubr.bf16.gmra.mrb[0].mxu0 %v287
    %v587 = vpop.f32.mrb[0].mxu0
    %v588 = vadd.f32 %v135, %v587
    %v589 = vpop.f32.mrb[0].mxu0
    %v590 = vpop.f32.mrb[0].mxu0
    %v591 = vadd.f32 %v135, %v590
    %v592 = vpop.f32.mrb[0].mxu0
    %593 = vmatprep.mubr.bf16.mxu0 0
    %594 = vmatmul.mubr.bf16.gmra.mrb[0].mxu0 %v288
    %v595 = vpop.f32.mrb[0].mxu0
    %v596 = vadd.f32 %v135, %v595
    %v597 = vpop.f32.mrb[0].mxu0
    %v598 = vpop.f32.mrb[0].mxu0
    %v599 = vadd.f32 %v135, %v598
    %v600 = vpop.f32.mrb[0].mxu0
    %601 = vmatprep.mubr.bf16.mxu0 0
    %602 = vmatmul.mubr.bf16.gmra.mrb[0].mxu0 %v289
    %v603 = vpop.f32.mrb[0].mxu0
    %v604 = vadd.f32 %v135, %v603
    %v605 = vpop.f32.mrb[0].mxu0
    %v606 = vpop.f32.mrb[0].mxu0
    %v607 = vadd.f32 %v135, %v606
    %v608 = vpop.f32.mrb[0].mxu0
    %609 = vmatprep.mubr.bf16.mxu0 0
    %610 = vmatmul.mubr.bf16.gmra.mrb[0].mxu0 %v290
    %v611 = vpop.f32.mrb[0].mxu0
    %v612 = vadd.f32 %v135, %v611
    %v613 = vpop.f32.mrb[0].mxu0
    %v614 = vpop.f32.mrb[0].mxu0
    %v615 = vadd.f32 %v135, %v614
    %v616 = vpop.f32.mrb[0].mxu0
    %617 = vmatprep.mubr.bf16.mxu0 0
    %618 = vmatmul.mubr.bf16.gmra.mrb[0].mxu0 %v291
    %v619 = vpop.f32.mrb[0].mxu0
    %v620 = vadd.f32 %v135, %v619
    %v621 = vpop.f32.mrb[0].mxu0
    %v622 = vpop.f32.mrb[0].mxu0
    %v623 = vadd.f32 %v135, %v622
    %v624 = vpop.f32.mrb[0].mxu0
    %625 = vmatprep.mubr.bf16.mxu0 0
    %626 = vmatmul.mubr.bf16.gmra.mrb[0].mxu0 %v292
    %v627 = vpop.f32.mrb[0].mxu0
    %v628 = vadd.f32 %v135, %v627
    %v629 = vpop.f32.mrb[0].mxu0
    %v630 = vpop.f32.mrb[0].mxu0
    %v631 = vadd.f32 %v135, %v630
    %v632 = vpop.f32.mrb[0].mxu0
    %633 = vmatprep.mubr.bf16.mxu0 0
    %634 = vmatmul.mubr.bf16.gmra.mrb[0].mxu0 %v293
    %v635 = vpop.f32.mrb[0].mxu0
    %v636 = vadd.f32 %v135, %v635
    %v637 = vpop.f32.mrb[0].mxu0
    %v638 = vpop.f32.mrb[0].mxu0
    %v639 = vadd.f32 %v135, %v638
    %v640 = vpop.f32.mrb[0].mxu0
    %641 = vmatprep.mubr.bf16.mxu0 0
    %642 = vmatmul.mubr.bf16.gmra.mrb[0].mxu0 %v294
    %v643 = vpop.f32.mrb[0].mxu0
    %v644 = vadd.f32 %v135, %v643
    %v645 = vpop.f32.mrb[0].mxu0
    %v646 = vpop.f32.mrb[0].mxu0
    %v647 = vadd.f32 %v135, %v646
    %v648 = vpop.f32.mrb[0].mxu0
    %649 = vmatprep.mubr.bf16.mxu0 0
    %650 = vmatmul.mubr.bf16.gmra.mrb[0].mxu0 %v295
    %v651 = vpop.f32.mrb[0].mxu0
    %v652 = vadd.f32 %v135, %v651
    %v653 = vpop.f32.mrb[0].mxu0
    %v654 = vpop.f32.mrb[0].mxu0
    %v655 = vadd.f32 %v135, %v654
    %v656 = vpop.f32.mrb[0].mxu0
    %657 = vmatprep.mubr.bf16.mxu0 0
    %658 = vmatmul.mubr.bf16.gmra.mrb[0].mxu0 %v296
    %v659 = vpop.f32.mrb[0].mxu0
    %v660 = vadd.f32 %v135, %v659
    %v661 = vpop.f32.mrb[0].mxu0
    %v662 = vpop.f32.mrb[0].mxu0
    %v663 = vadd.f32 %v135, %v662
    %v664 = vpop.f32.mrb[0].mxu0
    %665 = vdwg.mxu0
    %v666 = vmul.f32 %v412, %v412
    %v667 = vmul.f32 %v415, %v415
    %v668 = vmul.f32 %v420, %v420
    %v669 = vmul.f32 %v423, %v423
    %v670 = vmul.f32 %v428, %v428
    %v671 = vmul.f32 %v431, %v431
    %v672 = vmul.f32 %v436, %v436
    %v673 = vmul.f32 %v439, %v439
    %v674 = vmul.f32 %v444, %v444
    %v675 = vmul.f32 %v447, %v447
    %v676 = vmul.f32 %v452, %v452
    %v677 = vmul.f32 %v455, %v455
    %v678 = vmul.f32 %v460, %v460
    %v679 = vmul.f32 %v463, %v463
    %v680 = vmul.f32 %v468, %v468
    %v681 = vmul.f32 %v471, %v471
    %v682 = vmul.f32 %v476, %v476
    %v683 = vmul.f32 %v479, %v479
    %v684 = vmul.f32 %v484, %v484
    %v685 = vmul.f32 %v487, %v487
    %v686 = vmul.f32 %v492, %v492
    %v687 = vmul.f32 %v495, %v495
    %v688 = vmul.f32 %v500, %v500
    %v689 = vmul.f32 %v503, %v503
    %v690 = vmul.f32 %v508, %v508
    %v691 = vmul.f32 %v511, %v511
    %v692 = vmul.f32 %v516, %v516
    %v693 = vmul.f32 %v519, %v519
    %v694 = vmul.f32 %v524, %v524
    %v695 = vmul.f32 %v527, %v527
    %v696 = vmul.f32 %v532, %v532
    %v697 = vmul.f32 %v535, %v535
    %v698 = vmul.f32 %v540, %v540
    %v699 = vmul.f32 %v543, %v543
    %v700 = vmul.f32 %v548, %v548
    %v701 = vmul.f32 %v551, %v551
    %v702 = vmul.f32 %v556, %v556
    %v703 = vmul.f32 %v559, %v559
    %v704 = vmul.f32 %v564, %v564
    %v705 = vmul.f32 %v567, %v567
    %v706 = vmul.f32 %v572, %v572
    %v707 = vmul.f32 %v575, %v575
    %v708 = vmul.f32 %v580, %v580
    %v709 = vmul.f32 %v583, %v583
    %v710 = vmul.f32 %v588, %v588
    %v711 = vmul.f32 %v591, %v591
    %v712 = vmul.f32 %v596, %v596
    %v713 = vmul.f32 %v599, %v599
    %v714 = vmul.f32 %v604, %v604
    %v715 = vmul.f32 %v607, %v607
    %v716 = vmul.f32 %v612, %v612
    %v717 = vmul.f32 %v615, %v615
    %v718 = vmul.f32 %v620, %v620
    %v719 = vmul.f32 %v623, %v623
    %v720 = vmul.f32 %v628, %v628
    %v721 = vmul.f32 %v631, %v631
    %v722 = vmul.f32 %v636, %v636
    %v723 = vmul.f32 %v639, %v639
    %v724 = vmul.f32 %v644, %v644
    %v725 = vmul.f32 %v647, %v647
    %v726 = vmul.f32 %v652, %v652
    %v727 = vmul.f32 %v655, %v655
    %v728 = vmul.f32 %v660, %v660
    %v729 = vmul.f32 %v663, %v663
    %v730 = vmul.f32 %v412, %v666
    %v731 = vmul.f32 %v415, %v667
    %v732 = vmul.f32 %v420, %v668
    %v733 = vmul.f32 %v423, %v669
    %v734 = vmul.f32 %v428, %v670
    %v735 = vmul.f32 %v431, %v671
    %v736 = vmul.f32 %v436, %v672
    %v737 = vmul.f32 %v439, %v673
    %v738 = vmul.f32 %v444, %v674
    %v739 = vmul.f32 %v447, %v675
    %v740 = vmul.f32 %v452, %v676
    %v741 = vmul.f32 %v455, %v677
    %v742 = vmul.f32 %v460, %v678
    %v743 = vmul.f32 %v463, %v679
    %v744 = vmul.f32 %v468, %v680
    %v745 = vmul.f32 %v471, %v681
    %v746 = vmul.f32 %v476, %v682
    %v747 = vmul.f32 %v479, %v683
    %v748 = vmul.f32 %v484, %v684
    %v749 = vmul.f32 %v487, %v685
    %v750 = vmul.f32 %v492, %v686
    %v751 = vmul.f32 %v495, %v687
    %v752 = vmul.f32 %v500, %v688
    %v753 = vmul.f32 %v503, %v689
    %v754 = vmul.f32 %v508, %v690
    %v755 = vmul.f32 %v511, %v691
    %v756 = vmul.f32 %v516, %v692
    %v757 = vmul.f32 %v519, %v693
    %v758 = vmul.f32 %v524, %v694
    %v759 = vmul.f32 %v527, %v695
    %v760 = vmul.f32 %v532, %v696
    %v761 = vmul.f32 %v535, %v697
    %v762 = vmul.f32 %v540, %v698
    %v763 = vmul.f32 %v543, %v699
    %v764 = vmul.f32 %v548, %v700
    %v765 = vmul.f32 %v551, %v701
    %v766 = vmul.f32 %v556, %v702
    %v767 = vmul.f32 %v559, %v703
    %v768 = vmul.f32 %v564, %v704
    %v769 = vmul.f32 %v567, %v705
    %v770 = vmul.f32 %v572, %v706
    %v771 = vmul.f32 %v575, %v707
    %v772 = vmul.f32 %v580, %v708
    %v773 = vmul.f32 %v583, %v709
    %v774 = vmul.f32 %v588, %v710
    %v775 = vmul.f32 %v591, %v711
    %v776 = vmul.f32 %v596, %v712
    %v777 = vmul.f32 %v599, %v713
    %v778 = vmul.f32 %v604, %v714
    %v779 = vmul.f32 %v607, %v715
    %v780 = vmul.f32 %v612, %v716
    %v781 = vmul.f32 %v615, %v717
    %v782 = vmul.f32 %v620, %v718
    %v783 = vmul.f32 %v623, %v719
    %v784 = vmul.f32 %v628, %v720
    %v785 = vmul.f32 %v631, %v721
    %v786 = vmul.f32 %v636, %v722
    %v787 = vmul.f32 %v639, %v723
    %v788 = vmul.f32 %v644, %v724
    %v789 = vmul.f32 %v647, %v725
    %v790 = vmul.f32 %v652, %v726
    %v791 = vmul.f32 %v655, %v727
    %v792 = vmul.f32 %v660, %v728
    %v793 = vmul.f32 %v663, %v729
    %v794 = vmul.f32 %v730, 0.044715
    %v795 = vmul.f32 %v731, 0.044715
    %v796 = vmul.f32 %v732, 0.044715
    %v797 = vmul.f32 %v733, 0.044715
    %v798 = vmul.f32 %v734, 0.044715
    %v799 = vmul.f32 %v735, 0.044715
    %v800 = vmul.f32 %v736, 0.044715
    %v801 = vmul.f32 %v737, 0.044715
    %v802 = vmul.f32 %v738, 0.044715
    %v803 = vmul.f32 %v739, 0.044715
    %v804 = vmul.f32 %v740, 0.044715
    %v805 = vmul.f32 %v741, 0.044715
    %v806 = vmul.f32 %v742, 0.044715
    %v807 = vmul.f32 %v743, 0.044715
    %v808 = vmul.f32 %v744, 0.044715
    %v809 = vmul.f32 %v745, 0.044715
    %v810 = vmul.f32 %v746, 0.044715
    %v811 = vmul.f32 %v747, 0.044715
    %v812 = vmul.f32 %v748, 0.044715
    %v813 = vmul.f32 %v749, 0.044715
    %v814 = vmul.f32 %v750, 0.044715
    %v815 = vmul.f32 %v751, 0.044715
    %v816 = vmul.f32 %v752, 0.044715
    %v817 = vmul.f32 %v753, 0.044715
    %v818 = vmul.f32 %v754, 0.044715
    %v819 = vmul.f32 %v755, 0.044715
    %v820 = vmul.f32 %v756, 0.044715
    %v821 = vmul.f32 %v757, 0.044715
    %v822 = vmul.f32 %v758, 0.044715
    %v823 = vmul.f32 %v759, 0.044715
    %v824 = vmul.f32 %v760, 0.044715
    %v825 = vmul.f32 %v761, 0.044715
    %v826 = vmul.f32 %v762, 0.044715
    %v827 = vmul.f32 %v763, 0.044715
    %v828 = vmul.f32 %v764, 0.044715
    %v829 = vmul.f32 %v765, 0.044715
    %v830 = vmul.f32 %v766, 0.044715
    %v831 = vmul.f32 %v767, 0.044715
    %v832 = vmul.f32 %v768, 0.044715
    %v833 = vmul.f32 %v769, 0.044715
    %v834 = vmul.f32 %v770, 0.044715
    %v835 = vmul.f32 %v771, 0.044715
    %v836 = vmul.f32 %v772, 0.044715
    %v837 = vmul.f32 %v773, 0.044715
    %v838 = vmul.f32 %v774, 0.044715
    %v839 = vmul.f32 %v775, 0.044715
    %v840 = vmul.f32 %v776, 0.044715
    %v841 = vmul.f32 %v777, 0.044715
    %v842 = vmul.f32 %v778, 0.044715
    %v843 = vmul.f32 %v779, 0.044715
    %v844 = vmul.f32 %v780, 0.044715
    %v845 = vmul.f32 %v781, 0.044715
    %v846 = vmul.f32 %v782, 0.044715
    %v847 = vmul.f32 %v783, 0.044715
    %v848 = vmul.f32 %v784, 0.044715
    %v849 = vmul.f32 %v785, 0.044715
    %v850 = vmul.f32 %v786, 0.044715
    %v851 = vmul.f32 %v787, 0.044715
    %v852 = vmul.f32 %v788, 0.044715
    %v853 = vmul.f32 %v789, 0.044715
    %v854 = vmul.f32 %v790, 0.044715
    %v855 = vmul.f32 %v791, 0.044715
    %v856 = vmul.f32 %v792, 0.044715
    %v857 = vmul.f32 %v793, 0.044715
    %v858 = vadd.f32 %v412, %v794
    %v859 = vadd.f32 %v415, %v795
    %v860 = vadd.f32 %v420, %v796
    %v861 = vadd.f32 %v423, %v797
    %v862 = vadd.f32 %v428, %v798
    %v863 = vadd.f32 %v431, %v799
    %v864 = vadd.f32 %v436, %v800
    %v865 = vadd.f32 %v439, %v801
    %v866 = vadd.f32 %v444, %v802
    %v867 = vadd.f32 %v447, %v803
    %v868 = vadd.f32 %v452, %v804
    %v869 = vadd.f32 %v455, %v805
    %v870 = vadd.f32 %v460, %v806
    %v871 = vadd.f32 %v463, %v807
    %v872 = vadd.f32 %v468, %v808
    %v873 = vadd.f32 %v471, %v809
    %v874 = vadd.f32 %v476, %v810
    %v875 = vadd.f32 %v479, %v811
    %v876 = vadd.f32 %v484, %v812
    %v877 = vadd.f32 %v487, %v813
    %v878 = vadd.f32 %v492, %v814
    %v879 = vadd.f32 %v495, %v815
    %v880 = vadd.f32 %v500, %v816
    %v881 = vadd.f32 %v503, %v817
    %v882 = vadd.f32 %v508, %v818
    %v883 = vadd.f32 %v511, %v819
    %v884 = vadd.f32 %v516, %v820
    %v885 = vadd.f32 %v519, %v821
    %v886 = vadd.f32 %v524, %v822
    %v887 = vadd.f32 %v527, %v823
    %v888 = vadd.f32 %v532, %v824
    %v889 = vadd.f32 %v535, %v825
    %v890 = vadd.f32 %v540, %v826
    %v891 = vadd.f32 %v543, %v827
    %v892 = vadd.f32 %v548, %v828
    %v893 = vadd.f32 %v551, %v829
    %v894 = vadd.f32 %v556, %v830
    %v895 = vadd.f32 %v559, %v831
    %v896 = vadd.f32 %v564, %v832
    %v897 = vadd.f32 %v567, %v833
    %v898 = vadd.f32 %v572, %v834
    %v899 = vadd.f32 %v575, %v835
    %v900 = vadd.f32 %v580, %v836
    %v901 = vadd.f32 %v583, %v837
    %v902 = vadd.f32 %v588, %v838
    %v903 = vadd.f32 %v591, %v839
    %v904 = vadd.f32 %v596, %v840
    %v905 = vadd.f32 %v599, %v841
    %v906 = vadd.f32 %v604, %v842
    %v907 = vadd.f32 %v607, %v843
    %v908 = vadd.f32 %v612, %v844
    %v909 = vadd.f32 %v615, %v845
    %v910 = vadd.f32 %v620, %v846
    %v911 = vadd.f32 %v623, %v847
    %v912 = vadd.f32 %v628, %v848
    %v913 = vadd.f32 %v631, %v849
    %v914 = vadd.f32 %v636, %v850
    %v915 = vadd.f32 %v639, %v851
    %v916 = vadd.f32 %v644, %v852
    %v917 = vadd.f32 %v647, %v853
    %v918 = vadd.f32 %v652, %v854
    %v919 = vadd.f32 %v655, %v855
    %v920 = vadd.f32 %v660, %v856
    %v921 = vadd.f32 %v663, %v857
    %v922 = vmul.f32 %v858, 0.7978846
    %v923 = vmul.f32 %v859, 0.7978846
    %v924 = vmul.f32 %v860, 0.7978846
    %v925 = vmul.f32 %v861, 0.7978846
    %v926 = vmul.f32 %v862, 0.7978846
    %v927 = vmul.f32 %v863, 0.7978846
    %v928 = vmul.f32 %v864, 0.7978846
    %v929 = vmul.f32 %v865, 0.7978846
    %v930 = vmul.f32 %v866, 0.7978846
    %v931 = vmul.f32 %v867, 0.7978846
    %v932 = vmul.f32 %v868, 0.7978846
    %v933 = vmul.f32 %v869, 0.7978846
    %v934 = vmul.f32 %v870, 0.7978846
    %v935 = vmul.f32 %v871, 0.7978846
    %v936 = vmul.f32 %v872, 0.7978846
    %v937 = vmul.f32 %v873, 0.7978846
    %v938 = vmul.f32 %v874, 0.7978846
    %v939 = vmul.f32 %v875, 0.7978846
    %v940 = vmul.f32 %v876, 0.7978846
    %v941 = vmul.f32 %v877, 0.7978846
    %v942 = vmul.f32 %v878, 0.7978846
    %v943 = vmul.f32 %v879, 0.7978846
    %v944 = vmul.f32 %v880, 0.7978846
    %v945 = vmul.f32 %v881, 0.7978846
    %v946 = vmul.f32 %v882, 0.7978846
    %v947 = vmul.f32 %v883, 0.7978846
    %v948 = vmul.f32 %v884, 0.7978846
    %v949 = vmul.f32 %v885, 0.7978846
    %v950 = vmul.f32 %v886, 0.7978846
    %v951 = vmul.f32 %v887, 0.7978846
    %v952 = vmul.f32 %v888, 0.7978846
    %v953 = vmul.f32 %v889, 0.7978846
    %v954 = vmul.f32 %v890, 0.7978846
    %v955 = vmul.f32 %v891, 0.7978846
    %v956 = vmul.f32 %v892, 0.7978846
    %v957 = vmul.f32 %v893, 0.7978846
    %v958 = vmul.f32 %v894, 0.7978846
    %v959 = vmul.f32 %v895, 0.7978846
    %v960 = vmul.f32 %v896, 0.7978846
    %v961 = vmul.f32 %v897, 0.7978846
    %v962 = vmul.f32 %v898, 0.7978846
    %v963 = vmul.f32 %v899, 0.7978846
    %v964 = vmul.f32 %v900, 0.7978846
    %v965 = vmul.f32 %v901, 0.7978846
    %v966 = vmul.f32 %v902, 0.7978846
    %v967 = vmul.f32 %v903, 0.7978846
    %v968 = vmul.f32 %v904, 0.7978846
    %v969 = vmul.f32 %v905, 0.7978846
    %v970 = vmul.f32 %v906, 0.7978846
    %v971 = vmul.f32 %v907, 0.7978846
    %v972 = vmul.f32 %v908, 0.7978846
    %v973 = vmul.f32 %v909, 0.7978846
    %v974 = vmul.f32 %v910, 0.7978846
    %v975 = vmul.f32 %v911, 0.7978846
    %v976 = vmul.f32 %v912, 0.7978846
    %v977 = vmul.f32 %v913, 0.7978846
    %v978 = vmul.f32 %v914, 0.7978846
    %v979 = vmul.f32 %v915, 0.7978846
    %v980 = vmul.f32 %v916, 0.7978846
    %v981 = vmul.f32 %v917, 0.7978846
    %v982 = vmul.f32 %v918, 0.7978846
    %v983 = vmul.f32 %v919, 0.7978846
    %v984 = vmul.f32 %v920, 0.7978846
    %v985 = vmul.f32 %v921, 0.7978846
    %v986 = vtanh.pop %v922
    %v987 = vtanh.pop %v923
    %v988 = vtanh.pop %v924
    %v989 = vtanh.pop %v925
    %v990 = vtanh.pop %v926
    %v991 = vtanh.pop %v927
    %v992 = vtanh.pop %v928
    %v993 = vtanh.pop %v929
    %v994 = vtanh.pop %v930
    %v995 = vtanh.pop %v931
    %v996 = vtanh.pop %v932
    %v997 = vtanh.pop %v933
    %v998 = vtanh.pop %v934
    %v999 = vtanh.pop %v935
    %v1000 = vtanh.pop %v936
    %v1001 = vtanh.pop %v937
    %v1002 = vtanh.pop %v938
    %v1003 = vtanh.pop %v939
    %v1004 = vtanh.pop %v940
    %v1005 = vtanh.pop %v941
    %v1006 = vtanh.pop %v942
    %v1007 = vtanh.pop %v943
    %v1008 = vtanh.pop %v944
    %v1009 = vtanh.pop %v945
    %v1010 = vtanh.pop %v946
    %v1011 = vtanh.pop %v947
    %v1012 = vtanh.pop %v948
    %v1013 = vtanh.pop %v949
    %v1014 = vtanh.pop %v950
    %v1015 = vtanh.pop %v951
    %v1016 = vtanh.pop %v952
    %v1017 = vtanh.pop %v953
    %v1018 = vtanh.pop %v954
    %v1019 = vtanh.pop %v955
    %v1020 = vtanh.pop %v956
    %v1021 = vtanh.pop %v957
    %v1022 = vtanh.pop %v958
    %v1023 = vtanh.pop %v959
    %v1024 = vtanh.pop %v960
    %v1025 = vtanh.pop %v961
    %v1026 = vtanh.pop %v962
    %v1027 = vtanh.pop %v963
    %v1028 = vtanh.pop %v964
    %v1029 = vtanh.pop %v965
    %v1030 = vtanh.pop %v966
    %v1031 = vtanh.pop %v967
    %v1032 = vtanh.pop %v968
    %v1033 = vtanh.pop %v969
    %v1034 = vtanh.pop %v970
    %v1035 = vtanh.pop %v971
    %v1036 = vtanh.pop %v972
    %v1037 = vtanh.pop %v973
    %v1038 = vtanh.pop %v974
    %v1039 = vtanh.pop %v975
    %v1040 = vtanh.pop %v976
    %v1041 = vtanh.pop %v977
    %v1042 = vtanh.pop %v978
    %v1043 = vtanh.pop %v979
    %v1044 = vtanh.pop %v980
    %v1045 = vtanh.pop %v981
    %v1046 = vtanh.pop %v982
    %v1047 = vtanh.pop %v983
    %v1048 = vtanh.pop %v984
    %v1049 = vtanh.pop %v985
    %v1050 = vadd.f32 %v986, 1.0
    %v1051 = vadd.f32 %v987, 1.0
    %v1052 = vadd.f32 %v988, 1.0
    %v1053 = vadd.f32 %v989, 1.0
    %v1054 = vadd.f32 %v990, 1.0
    %v1055 = vadd.f32 %v991, 1.0
    %v1056 = vadd.f32 %v992, 1.0
    %v1057 = vadd.f32 %v993, 1.0
    %v1058 = vadd.f32 %v994, 1.0
    %v1059 = vadd.f32 %v995, 1.0
    %v1060 = vadd.f32 %v996, 1.0
    %v1061 = vadd.f32 %v997, 1.0
    %v1062 = vadd.f32 %v998, 1.0
    %v1063 = vadd.f32 %v999, 1.0
    %v1064 = vadd.f32 %v1000, 1.0
    %v1065 = vadd.f32 %v1001, 1.0
    %v1066 = vadd.f32 %v1002, 1.0
    %v1067 = vadd.f32 %v1003, 1.0
    %v1068 = vadd.f32 %v1004, 1.0
    %v1069 = vadd.f32 %v1005, 1.0
    %v1070 = vadd.f32 %v1006, 1.0
    %v1071 = vadd.f32 %v1007, 1.0
    %v1072 = vadd.f32 %v1008, 1.0
    %v1073 = vadd.f32 %v1009, 1.0
    %v1074 = vadd.f32 %v1010, 1.0
    %v1075 = vadd.f32 %v1011, 1.0
    %v1076 = vadd.f32 %v1012, 1.0
    %v1077 = vadd.f32 %v1013, 1.0
    %v1078 = vadd.f32 %v1014, 1.0
    %v1079 = vadd.f32 %v1015, 1.0
    %v1080 = vadd.f32 %v1016, 1.0
    %v1081 = vadd.f32 %v1017, 1.0
    %v1082 = vadd.f32 %v1018, 1.0
    %v1083 = vadd.f32 %v1019, 1.0
    %v1084 = vadd.f32 %v1020, 1.0
    %v1085 = vadd.f32 %v1021, 1.0
    %v1086 = vadd.f32 %v1022, 1.0
    %v1087 = vadd.f32 %v1023, 1.0
    %v1088 = vadd.f32 %v1024, 1.0
    %v1089 = vadd.f32 %v1025, 1.0
    %v1090 = vadd.f32 %v1026, 1.0
    %v1091 = vadd.f32 %v1027, 1.0
    %v1092 = vadd.f32 %v1028, 1.0
    %v1093 = vadd.f32 %v1029, 1.0
    %v1094 = vadd.f32 %v1030, 1.0
    %v1095 = vadd.f32 %v1031, 1.0
    %v1096 = vadd.f32 %v1032, 1.0
    %v1097 = vadd.f32 %v1033, 1.0
    %v1098 = vadd.f32 %v1034, 1.0
    %v1099 = vadd.f32 %v1035, 1.0
    %v1100 = vadd.f32 %v1036, 1.0
    %v1101 = vadd.f32 %v1037, 1.0
    %v1102 = vadd.f32 %v1038, 1.0
    %v1103 = vadd.f32 %v1039, 1.0
    %v1104 = vadd.f32 %v1040, 1.0
    %v1105 = vadd.f32 %v1041, 1.0
    %v1106 = vadd.f32 %v1042, 1.0
    %v1107 = vadd.f32 %v1043, 1.0
    %v1108 = vadd.f32 %v1044, 1.0
    %v1109 = vadd.f32 %v1045, 1.0
    %v1110 = vadd.f32 %v1046, 1.0
    %v1111 = vadd.f32 %v1047, 1.0
    %v1112 = vadd.f32 %v1048, 1.0
    %v1113 = vadd.f32 %v1049, 1.0
    %v1114 = vmul.f32 %v1050, 0.5
    %v1115 = vmul.f32 %v1051, 0.5
    %v1116 = vmul.f32 %v1052, 0.5
    %v1117 = vmul.f32 %v1053, 0.5
    %v1118 = vmul.f32 %v1054, 0.5
    %v1119 = vmul.f32 %v1055, 0.5
    %v1120 = vmul.f32 %v1056, 0.5
    %v1121 = vmul.f32 %v1057, 0.5
    %v1122 = vmul.f32 %v1058, 0.5
    %v1123 = vmul.f32 %v1059, 0.5
    %v1124 = vmul.f32 %v1060, 0.5
    %v1125 = vmul.f32 %v1061, 0.5
    %v1126 = vmul.f32 %v1062, 0.5
    %v1127 = vmul.f32 %v1063, 0.5
    %v1128 = vmul.f32 %v1064, 0.5
    %v1129 = vmul.f32 %v1065, 0.5
    %v1130 = vmul.f32 %v1066, 0.5
    %v1131 = vmul.f32 %v1067, 0.5
    %v1132 = vmul.f32 %v1068, 0.5
    %v1133 = vmul.f32 %v1069, 0.5
    %v1134 = vmul.f32 %v1070, 0.5
    %v1135 = vmul.f32 %v1071, 0.5
    %v1136 = vmul.f32 %v1072, 0.5
    %v1137 = vmul.f32 %v1073, 0.5
    %v1138 = vmul.f32 %v1074, 0.5
    %v1139 = vmul.f32 %v1075, 0.5
    %v1140 = vmul.f32 %v1076, 0.5
    %v1141 = vmul.f32 %v1077, 0.5
    %v1142 = vmul.f32 %v1078, 0.5
    %v1143 = vmul.f32 %v1079, 0.5
    %v1144 = vmul.f32 %v1080, 0.5
    %v1145 = vmul.f32 %v1081, 0.5
    %v1146 = vmul.f32 %v1082, 0.5
    %v1147 = vmul.f32 %v1083, 0.5
    %v1148 = vmul.f32 %v1084, 0.5
    %v1149 = vmul.f32 %v1085, 0.5
    %v1150 = vmul.f32 %v1086, 0.5
    %v1151 = vmul.f32 %v1087, 0.5
    %v1152 = vmul.f32 %v1088, 0.5
    %v1153 = vmul.f32 %v1089, 0.5
    %v1154 = vmul.f32 %v1090, 0.5
    %v1155 = vmul.f32 %v1091, 0.5
    %v1156 = vmul.f32 %v1092, 0.5
    %v1157 = vmul.f32 %v1093, 0.5
    %v1158 = vmul.f32 %v1094, 0.5
    %v1159 = vmul.f32 %v1095, 0.5
    %v1160 = vmul.f32 %v1096, 0.5
    %v1161 = vmul.f32 %v1097, 0.5
    %v1162 = vmul.f32 %v1098, 0.5
    %v1163 = vmul.f32 %v1099, 0.5
    %v1164 = vmul.f32 %v1100, 0.5
    %v1165 = vmul.f32 %v1101, 0.5
    %v1166 = vmul.f32 %v1102, 0.5
    %v1167 = vmul.f32 %v1103, 0.5
    %v1168 = vmul.f32 %v1104, 0.5
    %v1169 = vmul.f32 %v1105, 0.5
    %v1170 = vmul.f32 %v1106, 0.5
    %v1171 = vmul.f32 %v1107, 0.5
    %v1172 = vmul.f32 %v1108, 0.5
    %v1173 = vmul.f32 %v1109, 0.5
    %v1174 = vmul.f32 %v1110, 0.5
    %v1175 = vmul.f32 %v1111, 0.5
    %v1176 = vmul.f32 %v1112, 0.5
    %v1177 = vmul.f32 %v1113, 0.5
    %v1178 = vmul.f32 %v412, %v1114
    %v1179 = vmul.f32 %v415, %v1115
    %v1180 = vmul.f32 %v420, %v1116
    %v1181 = vmul.f32 %v423, %v1117
    %v1182 = vmul.f32 %v428, %v1118
    %v1183 = vmul.f32 %v431, %v1119
    %v1184 = vmul.f32 %v436, %v1120
    %v1185 = vmul.f32 %v439, %v1121
    %v1186 = vmul.f32 %v444, %v1122
    %v1187 = vmul.f32 %v447, %v1123
    %v1188 = vmul.f32 %v452, %v1124
    %v1189 = vmul.f32 %v455, %v1125
    %v1190 = vmul.f32 %v460, %v1126
    %v1191 = vmul.f32 %v463, %v1127
    %v1192 = vmul.f32 %v468, %v1128
    %v1193 = vmul.f32 %v471, %v1129
    %v1194 = vmul.f32 %v476, %v1130
    %v1195 = vmul.f32 %v479, %v1131
    %v1196 = vmul.f32 %v484, %v1132
    %v1197 = vmul.f32 %v487, %v1133
    %v1198 = vmul.f32 %v492, %v1134
    %v1199 = vmul.f32 %v495, %v1135
    %v1200 = vmul.f32 %v500, %v1136
    %v1201 = vmul.f32 %v503, %v1137
    %v1202 = vmul.f32 %v508, %v1138
    %v1203 = vmul.f32 %v511, %v1139
    %v1204 = vmul.f32 %v516, %v1140
    %v1205 = vmul.f32 %v519, %v1141
    %v1206 = vmul.f32 %v524, %v1142
    %v1207 = vmul.f32 %v527, %v1143
    %v1208 = vmul.f32 %v532, %v1144
    %v1209 = vmul.f32 %v535, %v1145
    %v1210 = vmul.f32 %v540, %v1146
    %v1211 = vmul.f32 %v543, %v1147
    %v1212 = vmul.f32 %v548, %v1148
    %v1213 = vmul.f32 %v551, %v1149
    %v1214 = vmul.f32 %v556, %v1150
    %v1215 = vmul.f32 %v559, %v1151
    %v1216 = vmul.f32 %v564, %v1152
    %v1217 = vmul.f32 %v567, %v1153
    %v1218 = vmul.f32 %v572, %v1154
    %v1219 = vmul.f32 %v575, %v1155
    %v1220 = vmul.f32 %v580, %v1156
    %v1221 = vmul.f32 %v583, %v1157
    %v1222 = vmul.f32 %v588, %v1158
    %v1223 = vmul.f32 %v591, %v1159
    %v1224 = vmul.f32 %v596, %v1160
    %v1225 = vmul.f32 %v599, %v1161
    %v1226 = vmul.f32 %v604, %v1162
    %v1227 = vmul.f32 %v607, %v1163
    %v1228 = vmul.f32 %v612, %v1164
    %v1229 = vmul.f32 %v615, %v1165
    %v1230 = vmul.f32 %v620, %v1166
    %v1231 = vmul.f32 %v623, %v1167
    %v1232 = vmul.f32 %v628, %v1168
    %v1233 = vmul.f32 %v631, %v1169
    %v1234 = vmul.f32 %v636, %v1170
    %v1235 = vmul.f32 %v639, %v1171
    %v1236 = vmul.f32 %v644, %v1172
    %v1237 = vmul.f32 %v647, %v1173
    %v1238 = vmul.f32 %v652, %v1174
    %v1239 = vmul.f32 %v655, %v1175
    %v1240 = vmul.f32 %v660, %v1176
    %v1241 = vmul.f32 %v663, %v1177
    %v1242 = vpack.c.bf16 %v1179, %v1178
    %v1243 = vpack.c.bf16 %v1181, %v1180
    %v1244 = vpack.c.bf16 %v1183, %v1182
    %v1245 = vpack.c.bf16 %v1185, %v1184
    %v1246 = vpack.c.bf16 %v1187, %v1186
    %v1247 = vpack.c.bf16 %v1189, %v1188
    %v1248 = vpack.c.bf16 %v1191, %v1190
    %v1249 = vpack.c.bf16 %v1193, %v1192
    %v1250 = vpack.c.bf16 %v1195, %v1194
    %v1251 = vpack.c.bf16 %v1197, %v1196
    %v1252 = vpack.c.bf16 %v1199, %v1198
    %v1253 = vpack.c.bf16 %v1201, %v1200
    %v1254 = vpack.c.bf16 %v1203, %v1202
    %v1255 = vpack.c.bf16 %v1205, %v1204
    %v1256 = vpack.c.bf16 %v1207, %v1206
    %v1257 = vpack.c.bf16 %v1209, %v1208
    %v1258 = vpack.c.bf16 %v1211, %v1210
    %v1259 = vpack.c.bf16 %v1213, %v1212
    %v1260 = vpack.c.bf16 %v1215, %v1214
    %v1261 = vpack.c.bf16 %v1217, %v1216
    %v1262 = vpack.c.bf16 %v1219, %v1218
    %v1263 = vpack.c.bf16 %v1221, %v1220
    %v1264 = vpack.c.bf16 %v1223, %v1222
    %v1265 = vpack.c.bf16 %v1225, %v1224
    %v1266 = vpack.c.bf16 %v1227, %v1226
    %v1267 = vpack.c.bf16 %v1229, %v1228
    %v1268 = vpack.c.bf16 %v1231, %v1230
    %v1269 = vpack.c.bf16 %v1233, %v1232
    %v1270 = vpack.c.bf16 %v1235, %v1234
    %v1271 = vpack.c.bf16 %v1237, %v1236
    %v1272 = vpack.c.bf16 %v1239, %v1238
    %v1273 = vpack.c.bf16 %v1241, %v1240
    %v1274 = vld [vmem:[%s3] sm:$0xf]
    %v1275 = vld [vmem:[%s4] sm:$0xff]
    %1277 = vset.pattern.permute.xlu0 0
    %1278 = vperm.xlu0 %1277, %v1275
    %v1279 = vpop.permute.xlu0 %1278
    %1281 = vmatprep.subr.bf16.mxu0 0
    %1282 = vmatpush1.bf16.xpose.msra.mxu0 %v1242
    %1283 = vmatprep.subr.bf16.mxu0 0
    %1284 = vmatpush1.bf16.xpose.msra.mxu0 %v1243
    %1285 = vmatprep.subr.bf16.mxu0 0
    %1286 = vmatpush1.bf16.xpose.msra.mxu0 %v1244
    %1287 = vmatprep.subr.bf16.mxu0 0
    %1288 = vmatpush1.bf16.xpose.msra.mxu0 %v1245
    %1289 = vmatprep.subr.bf16.mxu0 0
    %1290 = vmatpush1.bf16.xpose.msra.mxu0 %v1246
    %1291 = vmatprep.subr.bf16.mxu0 0
    %1292 = vmatpush1.bf16.xpose.msra.mxu0 %v1247
    %1293 = vmatprep.subr.bf16.mxu0 0
    %1294 = vmatpush1.bf16.xpose.msra.mxu0 %v1248
    %1295 = vmatprep.subr.bf16.mxu0 0
    %1296 = vmatpush1.bf16.xpose.msra.mxu0 %v1249
    %1297 = vmatprep.subr.bf16.mxu0 0
    %1298 = vmatpush1.bf16.xpose.msra.mxu0 %v1250
    %1299 = vmatprep.subr.bf16.mxu0 0
    %1300 = vmatpush1.bf16.xpose.msra.mxu0 %v1251
    %1301 = vmatprep.subr.bf16.mxu0 0
    %1302 = vmatpush1.bf16.xpose.msra.mxu0 %v1252
    %1303 = vmatprep.subr.bf16.mxu0 0
    %1304 = vmatpush1.bf16.xpose.msra.mxu0 %v1253
    %1305 = vmatprep.subr.bf16.mxu0 0
    %1306 = vmatpush1.bf16.xpose.msra.mxu0 %v1254
    %1307 = vmatprep.subr.bf16.mxu0 0
    %1308 = vmatpush1.bf16.xpose.msra.mxu0 %v1255
    %1309 = vmatprep.subr.bf16.mxu0 0
    %1310 = vmatpush1.bf16.xpose.msra.mxu0 %v1256
    %1311 = vmatprep.subr.bf16.mxu0 0
    %1312 = vmatpush1.bf16.xpose.msra.mxu0 %v1257
    %1313 = vmatprep.mubr.bf16.mxu0 0
    %1314 = vmatmul.mubr.bf16.gmra.mrb[0].mxu0 %v1274
    %v1315 = vpop.f32.mrb[0].mxu0
    %v1316 = vadd.f32 %v1279, %v1315
    %v1317 = vpop.f32.mrb[0].mxu0
    %v1318 = vadd.f32 %v1279, %v1317
    %v1319 = vpop.f32.mrb[0].mxu0
    %v1320 = vpop.f32.mrb[0].mxu0
    %1321 = vdwg.mxu0
    %1322 = vmatprep.subr.bf16.mxu0 0
    %1323 = vmatpush1.bf16.xpose.msra.mxu0 %v1258
    %1324 = vmatprep.subr.bf16.mxu0 0
    %1325 = vmatpush1.bf16.xpose.msra.mxu0 %v1259
    %1326 = vmatprep.subr.bf16.mxu0 0
    %1327 = vmatpush1.bf16.xpose.msra.mxu0 %v1260
    %1328 = vmatprep.subr.bf16.mxu0 0
    %1329 = vmatpush1.bf16.xpose.msra.mxu0 %v1261
    %1330 = vmatprep.subr.bf16.mxu0 0
    %1331 = vmatpush1.bf16.xpose.msra.mxu0 %v1262
    %1332 = vmatprep.subr.bf16.mxu0 0
    %1333 = vmatpush1.bf16.xpose.msra.mxu0 %v1263
    %1334 = vmatprep.subr.bf16.mxu0 0
    %1335 = vmatpush1.bf16.xpose.msra.mxu0 %v1264
    %1336 = vmatprep.subr.bf16.mxu0 0
    %1337 = vmatpush1.bf16.xpose.msra.mxu0 %v1265
    %1338 = vmatprep.subr.bf16.mxu0 0
    %1339 = vmatpush1.bf16.xpose.msra.mxu0 %v1266
    %1340 = vmatprep.subr.bf16.mxu0 0
    %1341 = vmatpush1.bf16.xpose.msra.mxu0 %v1267
    %1342 = vmatprep.subr.bf16.mxu0 0
    %1343 = vmatpush1.bf16.xpose.msra.mxu0 %v1268
    %1344 = vmatprep.subr.bf16.mxu0 0
    %1345 = vmatpush1.bf16.xpose.msra.mxu0 %v1269
    %1346 = vmatprep.subr.bf16.mxu0 0
    %1347 = vmatpush1.bf16.xpose.msra.mxu0 %v1270
    %1348 = vmatprep.subr.bf16.mxu0 0
    %1349 = vmatpush1.bf16.xpose.msra.mxu0 %v1271
    %1350 = vmatprep.subr.bf16.mxu0 0
    %1351 = vmatpush1.bf16.xpose.msra.mxu0 %v1272
    %1352 = vmatprep.subr.bf16.mxu0 0
    %1353 = vmatpush1.bf16.xpose.msra.mxu0 %v1273
    %1354 = vmatprep.mubr.bf16.mxu0 0
    %1355 = vmatmul.mubr.bf16.gmra.mrb[0].mxu0 %v1274
    %v1356 = vpop.f32.mrb[0].mxu0
    %v1357 = vadd.f32 %v1279, %v1356
    %v1358 = vpop.f32.mrb[0].mxu0
    %v1359 = vadd.f32 %v1279, %v1358
    %v1360 = vpop.f32.mrb[0].mxu0
    %v1361 = vpop.f32.mrb[0].mxu0
    %1362 = vdwg.mxu0
    %1363 = vst [vmem:[#allocation7] sm:$0xff] %v1316
    %1364 = vst [vmem:[#allocation7 + $0x8] sm:$0xff] %v1318
    %1365 = vst [vmem:[#allocation7 + $0x10] sm:$0xff] %v1357
    %1366 = vst [vmem:[#allocation7 + $0x18] sm:$0xff] %v1359
    // Predicated region
    $region30: #{tpu_custom_call.1} parent=1 // pred_check
      _
    $region31: #{tpu_custom_call.1} parent=1 // pred_check_branch
      %1368 = sbr.rel (0) target = $region33
    $region32: #{tpu_custom_call.1} parent=1 // pred_region
      %s1370 = ssub.s32 512, 512
      %1371 = vsyncadd [#allocation4], %s1370
      %s1373 = sshll.u32 [#allocation7], 4
      %s1374 = int_to_ptr.vmem [resolvable:$true] %s1373
      %1376 = dma.vmem_to_hbm [thread:$0]  %s1374, 512, %s5, [#allocation4]
    $region33: #{tpu_custom_call.1} parent=1 // pred_fallthru
      _
    // Predicated region
    $region34: #{tpu_custom_call.1} parent=1 // pred_check
      _
    $region35: #{tpu_custom_call.1} parent=1 // pred_check_branch
      %1378 = sbr.rel (0) target = $region37
    $region36: #{tpu_custom_call.1} parent=1 // pred_region
      %1379 = dma.done [#allocation4], 512
    $region37: #{tpu_custom_call.1} parent=1 // pred_fallthru
      _
    %1380 = vsyncpa [#allocation3], 1
    %1381 = vsyncpa [#allocation6], 1
    %1382 = vsyncpa [#allocation4], 1

</llo_original>
